<compile_context>
chip_gen: v5e
topology: v5e:2x2
jax: 0.10.0
libtpu: 0.0.40
codegen_flags: <defaults>
</compile_context>

<pallas_src>
import jax
import jax.numpy as jnp
from jax.experimental import pallas as pl
from jax.experimental.pallas import tpu as pltpu

_LANE = 128
_SUBLANE = 8


def _h_swish_kernel(x_ref, o_ref):
    x = x_ref[...].astype(jnp.float32)
    hs = jnp.clip(x + 3.0, 0.0, 6.0) * (1.0 / 6.0)   # h_sigmoid
    o_ref[...] = (x * hs).astype(o_ref.dtype)


def h_swish(
    x: jax.Array,
    *,
    target_block_bytes: int = 2 << 20,   # ~2 MiB blocks: safe on v5e/v6e/v7x
    donate_input: bool = False,          # set True if callers can donate x
) -> jax.Array:
    """Applies h_swish elementwise to an arbitrary-shape tensor (e.g. NCHW)."""
    orig_shape = x.shape
    dtype = x.dtype
    itemsize = jnp.dtype(dtype).itemsize
    total = x.size
    if total == 0:
        return x

    # ---- choose a lane-dense 2-D slab layout -------------------------------
    # Prefer a multiple-of-128 column width that divides `total` exactly so the
    # reshape is a zero-copy bitcast of the contiguous NCHW buffer.
    cols = 0
    for cand in (4096, 2048, 1024, 512, 256, 128):
        if total % cand == 0:
            cols = cand
            break

    if cols:
        x2d = x.reshape(total // cols, cols)          # free (contiguous) view
        padded = total
    else:
        # Rare path: total not a multiple of 128 -> pad the flat tail only.
        cols = _LANE
        rows_p = pl.cdiv(total, cols)
        padded = rows_p * cols
        x2d = jnp.pad(x.reshape(-1), (0, padded - total)).reshape(rows_p, cols)

    rows = x2d.shape[0]

    # block_rows sized so each block is ~target_block_bytes (multiple of 8
    # sublanes); if the whole array fits in one block, take the full extent
    # (full-dim block satisfies the (8,128) rule even for non-multiple rows).
    block_rows = max(
        _SUBLANE,
        (target_block_bytes // (cols * itemsize)) // _SUBLANE * _SUBLANE,
    )
    if block_rows >= rows:
        block_rows = rows

    grid = (pl.cdiv(rows, block_rows),)   # partial last block is masked

    cost = pl.CostEstimate(
        flops=5 * total,
        transcendentals=0,
        bytes_accessed=2 * total * itemsize,
    )

    out2d = pl.pallas_call(
        _h_swish_kernel,
        out_shape=jax.ShapeDtypeStruct((rows, cols), dtype),
        grid=grid,
        in_specs=[pl.BlockSpec((block_rows, cols), lambda i: (i, 0))],
        out_specs=pl.BlockSpec((block_rows, cols), lambda i: (i, 0)),
        compiler_params=pltpu.CompilerParams(
            dimension_semantics=("parallel",),
        ),
        cost_estimate=cost,
        input_output_aliases=({0: 0} if donate_input else {}),
    )(x2d)

    out_flat = out2d.reshape(-1)
    if padded != total:
        out_flat = out_flat[:total]
    return out_flat.reshape(orig_shape)


def _h_swish_ref(x):
    xf = x.astype(jnp.float32)
    return (xf * jnp.clip(xf + 3.0, 0.0, 6.0) / 6.0).astype(x.dtype)


if __name__ == "__main__":
    key = jax.random.PRNGKey(0)

    # Small NCHW input consistent with the module's forward (zero-copy path:
    # total = 2*4*16*16 = 2048 is a multiple of 128).
    x = jax.random.normal(key, (2, 4, 16, 16), dtype=jnp.float32) * 4.0
    out = jax.block_until_ready(h_swish(x))
    assert out.shape == x.shape and out.dtype == x.dtype
    assert jnp.allclose(out, _h_swish_ref(x), atol=1e-6, rtol=1e-6), "mismatch vs reference"

    # Non-lane-aligned spatial size (7x7 -> total=294) exercises the padded path.
    x2 = jax.random.normal(jax.random.PRNGKey(1), (2, 3, 7, 7), dtype=jnp.float32) * 4.0
    out2 = jax.block_until_ready(h_swish(x2))
    assert jnp.allclose(out2, _h_swish_ref(x2), atol=1e-6, rtol=1e-6), "mismatch (padded path)"

    # bf16 input (sub-32-bit compute-in-f32 path).
    x3 = (jax.random.normal(jax.random.PRNGKey(2), (2, 4, 16, 16)) * 4.0).astype(jnp.bfloat16)
    out3 = jax.block_until_ready(h_swish(x3))
    assert out3.dtype == jnp.bfloat16
    assert jnp.allclose(out3.astype(jnp.float32), _h_swish_ref(x3).astype(jnp.float32),
                        atol=3e-2, rtol=3e-2), "mismatch (bf16 path)"

    print("KERNEL_OK")
</pallas_src>

<mosaic_0001>
module attributes {stable_mosaic.version = 11 : i64} {
  func.func @_h_swish_kernel(%arg0: i32, %arg1: memref<1x2048xf32, #tpu.memory_space<vmem>>, %arg2: memref<1x2048xf32, #tpu.memory_space<vmem>>) attributes {dimension_semantics = [#tpu.dimension_semantics<parallel>], iteration_bounds = array<i64: 1>, scalar_prefetch = 0 : i64, scratch_operands = 0 : i64, tpu.core_type = #tpu.core_type<tc>, window_params = [{transform_indices = @transform_0, window_bounds = array<i64: 1, 2048>}, {transform_indices = @transform_1, window_bounds = array<i64: 1, 2048>}]} {
    %c0 = arith.constant 0 : index
    %c0_0 = arith.constant 0 : index
    %0 = vector.load %arg1[%c0, %c0_0] : memref<1x2048xf32, #tpu.memory_space<vmem>>, vector<1x2048xf32>
    %cst = arith.constant 3.000000e+00 : f32
    %1 = vector.broadcast %cst : f32 to vector<1x2048xf32>
    %2 = arith.addf %0, %1 : vector<1x2048xf32>
    %cst_1 = arith.constant 0.000000e+00 : f32
    %cst_2 = arith.constant 6.000000e+00 : f32
    %3 = vector.broadcast %cst_1 : f32 to vector<1x2048xf32>
    %4 = arith.maximumf %3, %2 : vector<1x2048xf32>
    %5 = vector.broadcast %cst_2 : f32 to vector<1x2048xf32>
    %6 = arith.minimumf %5, %4 : vector<1x2048xf32>
    %cst_3 = arith.constant 0.166666672 : f32
    %7 = vector.broadcast %cst_3 : f32 to vector<1x2048xf32>
    %8 = arith.mulf %6, %7 : vector<1x2048xf32>
    %9 = arith.mulf %0, %8 : vector<1x2048xf32>
    %c0_4 = arith.constant 0 : index
    %c0_5 = arith.constant 0 : index
    %10 = vector.load %arg2[%c0_4, %c0_5] : memref<1x2048xf32, #tpu.memory_space<vmem>>, vector<1x2048xf32>
    tpu.vector_store %arg2[%c0_4, %c0_5], %9 {strides = array<i32>} : memref<1x2048xf32, #tpu.memory_space<vmem>>, vector<1x2048xf32>,
    return
  }
  func.func @transform_0(%arg0: i32) -> (i32, i32) {
    %c0_i32 = arith.constant 0 : i32
    %c0_i32_0 = arith.constant 0 : i32
    return %arg0, %c0_i32 : i32, i32
  }
  func.func @transform_1(%arg0: i32) -> (i32, i32) {
    %c0_i32 = arith.constant 0 : i32
    %c0_i32_0 = arith.constant 0 : i32
    return %arg0, %c0_i32 : i32, i32
  }
}

</mosaic_0001>

<llo_original>
// kernel: tpu_custom_call.1
$region0: #{tpu_custom_call.1}
  #allocation0 [shape = 'u32[]', space=smem, size = 0x4, offset = 0x4, fixed_abs, tag = 'smem constant byte address 0x4 - core index']
  #allocation1 [shape = 'u32[72,128]{1,0:T(1,128)}', space=vmem, size = 0x9000, scoped, tag = 'internal scratch']
  %s0 = inlined_call_operand.hbm [shape: f32[1,2048], index: 0, kind: input, shape index: {}]
  %s1 = inlined_call_operand.hbm [shape: f32[1,2048], index: 1, kind: output, shape index: {}]
  %s2 = sld [smem:[#allocation0]]
  $region18: #{tpu_custom_call.1} parent=0
    _
  %s4 = ssub.s32 1, %s2
  %s5 = scalar_select 0, %s4, %s2
  $region1: #{tpu_custom_call.1} parent=0
    #allocation2 [shape = 'u8[8192]{0}', space=vmem, size = 0x2000, scoped, tag = 'input window, operand 0, single buffered']
    #allocation3 [shape = 's32[1]{0}', space=sflag, size = 0x4, scoped, tag = 'scoped memory for tpu_custom_call.1']
    #allocation4 [shape = 's32[1]{0}', space=sflag, size = 0x4, scoped, tag = 'scoped memory for tpu_custom_call.1']
    #allocation5 [shape = 'u8[8192]{0}', space=vmem, size = 0x2000, scoped, tag = 'output window, operand 0, single buffered']
    %6 = vsyncpa [#allocation3], 0
    %7 = vsyncpa [#allocation4], 0
    // Predicated region
    $region2: #{tpu_custom_call.1} parent=1 // pred_check
      _
    $region3: #{tpu_custom_call.1} parent=1 // pred_check_branch
      %9 = sbr.rel (0) target = $region5
    $region4: #{tpu_custom_call.1} parent=1 // pred_region
      %11 = vsyncadd [#allocation3], 0
      %s13 = sshll.u32 %s0, 4
      %s14 = int_to_ptr.hbm [resolvable:$true] %s13
      %s15 = sshll.u32 [#allocation2], 4
      %s16 = int_to_ptr.vmem [resolvable:$true] %s15
      %18 = dma.hbm_to_vmem [thread:$0]  %s14, 256, %s16, [#allocation3]
    $region5: #{tpu_custom_call.1} parent=1 // pred_fallthru
      _
    // Predicated region
    $region6: #{tpu_custom_call.1} parent=1 // pred_check
      _
    $region7: #{tpu_custom_call.1} parent=1 // pred_check_branch
      %20 = sbr.rel (0) target = $region9
    $region8: #{tpu_custom_call.1} parent=1 // pred_region
      %22 = dma.done [#allocation3], 256
    $region9: #{tpu_custom_call.1} parent=1 // pred_fallthru
      _
    %v23 = vld [vmem:[#allocation2] sm:$0xff]
    %v24 = vld [vmem:[#allocation2 + $0x8] sm:$0xff]
    %v25 = vadd.f32 %v23, 3.0
    %v26 = vadd.f32 %v24, 3.0
    %v27 = vmax.f32 %v25, 0.0
    %v28 = vmax.f32 %v26, 0.0
    %v29 = vmin.f32 %v27, 6.0
    %v30 = vmin.f32 %v28, 6.0
    %v31 = vmul.f32 %v29, 0.16666667
    %v32 = vmul.f32 %v30, 0.16666667
    %v33 = vmul.f32 %v23, %v31
    %v34 = vmul.f32 %v24, %v32
    %35 = vst [vmem:[#allocation5] sm:$0xff] %v33
    %36 = vst [vmem:[#allocation5 + $0x8] sm:$0xff] %v34
    // Predicated region
    $region10: #{tpu_custom_call.1} parent=1 // pred_check
      _
    $region11: #{tpu_custom_call.1} parent=1 // pred_check_branch
      %38 = sbr.rel (0) target = $region13
    $region12: #{tpu_custom_call.1} parent=1 // pred_region
      %40 = vsyncadd [#allocation4], 0
      %s42 = sshll.u32 [#allocation5], 4
      %s43 = int_to_ptr.vmem [resolvable:$true] %s42
      %s44 = sshll.u32 %s1, 4
      %s45 = int_to_ptr.hbm [resolvable:$true] %s44
      %47 = dma.vmem_to_hbm [thread:$0]  %s43, 256, %s45, [#allocation4]
    $region13: #{tpu_custom_call.1} parent=1 // pred_fallthru
      _
    // Predicated region
    $region14: #{tpu_custom_call.1} parent=1 // pred_check
      _
    $region15: #{tpu_custom_call.1} parent=1 // pred_check_branch
      %49 = sbr.rel (0) target = $region17
    $region16: #{tpu_custom_call.1} parent=1 // pred_region
      %51 = dma.done [#allocation4], 256
    $region17: #{tpu_custom_call.1} parent=1 // pred_fallthru
      _
    %52 = vsyncpa [#allocation3], 1
    %53 = vsyncpa [#allocation4], 1

</llo_original>
